<compile_context>
chip_gen: v6e
topology: v6e:2x2x1
jax: 0.10.0
libtpu: 0.0.40
codegen_flags: <defaults>
</compile_context>

<pallas_src>
import functools

import jax
import jax.numpy as jnp
from jax.experimental import pallas as pl
from jax.experimental.pallas import tpu as pltpu

LANES = 128
NCORES = 2                       # "parallel" axis: both TCs on v7x, ~free serial loop on v5e/v6e
MAX_BLOCK_ROWS = 4096            # hard cap so f32 temporaries stay <= 2 MiB/block
TARGET_BLOCK_BYTES = 2 << 20     # ~2 MiB per input block (>= roofline knee)
VMEM_LIMIT_BYTES = 32 * 1024 * 1024   # safe on v5e (128 MiB phys), v6e (128), v7x (64)


def _round_up(v, m):
    return ((v + m - 1) // m) * m


def _sublane_multiple(*dtypes):
    # f32 -> 8, bf16/f16 -> 16, int8/bool/fp8 -> 32 (sub-32-bit sublane packing)
    m = 8
    for dt in dtypes:
        m = max(m, 32 // max(jnp.dtype(dt).itemsize, 1))
    return m


def _focal_tversky_partial_kernel(x_ref, y_ref, tp_ref, ps_ref, pt_ref,
                                  *, n_valid, steps):
    """Accumulate per-core (8,128) partial sums of sigmoid(x)*y, sigmoid(x), y."""
    c = pl.program_id(0)
    i = pl.program_id(1)
    block_rows = x_ref.shape[0]
    block_elems = block_rows * LANES

    @pl.when(i == 0)
    def _():
        tp_ref[...] = jnp.zeros_like(tp_ref)
        ps_ref[...] = jnp.zeros_like(ps_ref)
        pt_ref[...] = jnp.zeros_like(pt_ref)

    x = x_ref[...].astype(jnp.float32)
    y = y_ref[...].astype(jnp.float32)
    s = jax.nn.sigmoid(x)

    def accumulate(s_blk, y_blk):
        # Fold (block_rows, 128) down to an (8, 128) vreg-shaped partial with
        # pure VPU adds (no cross-lane XLU work in the hot loop).
        groups = block_rows // 8
        tp_ref[0] += (s_blk * y_blk).reshape(groups, 8, LANES).sum(axis=0)
        ps_ref[0] += s_blk.reshape(groups, 8, LANES).sum(axis=0)
        pt_ref[0] += y_blk.reshape(groups, 8, LANES).sum(axis=0)

    # Flat element offset of this *logical* block (steps / n_valid are static
    # Python ints baked in at trace time).  NOTE: int32 indices -> n < 2**31.
    start_elem = (c * steps + i) * block_elems

    @pl.when(start_elem + block_elems <= n_valid)
    def _():  # fast path: every element in the block is real data
        accumulate(s, y)

    @pl.when(start_elem + block_elems > n_valid)
    def _():  # ragged tail: mask wrapper-pad / out-of-bounds garbage rows
        row_id = jax.lax.broadcasted_iota(jnp.int32, (block_rows, LANES), 0)
        lane_id = jax.lax.broadcasted_iota(jnp.int32, (block_rows, LANES), 1)
        valid = (row_id * LANES + lane_id) < (n_valid - start_elem)
        # where-select (not multiply) so NaN/Inf garbage in OOB rows is safe.
        accumulate(jnp.where(valid, s, 0.0), jnp.where(valid, y, 0.0))


def focal_tversky_loss(inputs, targets, smooth=1.0, alpha=0.5, beta=0.5,
                       gamma=1.0, target_block_bytes=TARGET_BLOCK_BYTES):
    """Matches FocalTverskyLoss.forward: sigmoid -> flatten -> Tversky -> focal."""
    x = jnp.ravel(inputs)            # free reshape; keep native dtype (cast in-kernel)
    y = jnp.ravel(targets)
    if y.dtype == jnp.bool_:         # bool refs are awkward on TPU; cheap cast
        y = y.astype(jnp.int8)
    n = x.shape[0]

    if n == 0:
        return jnp.power(jnp.array(0.0, jnp.float32), gamma)

    # Only pad to complete the final 128-lane row (rare; value irrelevant since
    # the kernel masks by element index).  No block-alignment padding anymore.
    # TODO(synk): this residual pad still copies the stream once when numel%128!=0.
    rem = (-n) % LANES
    if rem:
        x = jnp.pad(x, (0, rem))
        y = jnp.pad(y, (0, rem))
    rows = (n + rem) // LANES

    # Block sizing: ~target_block_bytes per input block, rounded to the
    # dtype-correct sublane multiple, hard-capped so f32 temporaries stay small
    # on all generations (v5e 16 MiB default scoped, v7x 64 MiB physical VMEM).
    mult = _sublane_multiple(x.dtype, y.dtype)
    max_item = max(x.dtype.itemsize, y.dtype.itemsize)
    rows_for_bytes = max(mult, (target_block_bytes // (LANES * max_item)) // mult * mult)
    max_rows = max(mult, min(MAX_BLOCK_ROWS, rows_for_bytes))
    per_core_rows = pl.cdiv(rows, NCORES)
    block_rows = max(mult, min(max_rows, _round_up(per_core_rows, mult)))

    steps = pl.cdiv(rows, NCORES * block_rows)
    last_blk = pl.cdiv(rows, block_rows) - 1   # last block index with any real rows

    x2 = x.reshape(rows, LANES)
    y2 = y.reshape(rows, LANES)

    def in_map(c, i):
        # Clamp so a fully out-of-range trailing grid step re-reads the last
        # in-bounds block (its contribution is masked to zero in-kernel)
        # instead of issuing an out-of-bounds DMA.
        return (jnp.minimum(c * steps + i, last_blk), 0)

    in_spec = pl.BlockSpec((block_rows, LANES), in_map)
    out_spec = pl.BlockSpec((1, 8, LANES), lambda c, i: (c, 0, 0))
    acc_shape = jax.ShapeDtypeStruct((NCORES, 8, LANES), jnp.float32)

    kernel = functools.partial(_focal_tversky_partial_kernel,
                               n_valid=n, steps=steps)

    tp_p, s_p, t_p = pl.pallas_call(
        kernel,
        out_shape=(acc_shape, acc_shape, acc_shape),
        grid_spec=pltpu.PrefetchScalarGridSpec(
            num_scalar_prefetch=0,
            grid=(NCORES, steps),
            in_specs=[in_spec, in_spec],
            out_specs=[out_spec, out_spec, out_spec],
        ),
        compiler_params=pltpu.CompilerParams(
            dimension_semantics=("parallel", "arbitrary"),
            vmem_limit_bytes=VMEM_LIMIT_BYTES),
    )(x2, y2)

    # Tiny scalar epilogue (single cross-lane reduce + Tversky/focal formula).
    TP = jnp.sum(tp_p)
    S = jnp.sum(s_p)
    T = jnp.sum(t_p)
    FP = S - TP
    FN = T - TP
    tversky = (TP + smooth) / (TP + alpha * FP + beta * FN + smooth)
    # Clamp guards against a tiny negative (1 - tversky) under non-integer gamma.
    return jnp.power(jnp.maximum(1.0 - tversky, 0.0), gamma)


def _reference(inputs, targets, smooth=1.0, alpha=0.5, beta=0.5, gamma=1.0):
    s = jax.nn.sigmoid(inputs.astype(jnp.float32)).ravel()
    t = targets.astype(jnp.float32).ravel()
    TP = jnp.sum(s * t)
    FP = jnp.sum((1.0 - t) * s)
    FN = jnp.sum(t * (1.0 - s))
    tversky = (TP + smooth) / (TP + alpha * FP + beta * FN + smooth)
    return jnp.power(1.0 - tversky, gamma)


if __name__ == "__main__":
    key = jax.random.PRNGKey(0)
    k1, k2, k3, k4, k5, k6 = jax.random.split(key, 6)

    # 1) Canonical NCHW logits and binary targets (module has no parameters).
    x1 = jax.random.normal(k1, (2, 4, 16, 16), dtype=jnp.float32)
    y1 = (jax.random.uniform(k2, (2, 4, 16, 16)) > 0.5).astype(jnp.float32)
    out1 = jax.block_until_ready(focal_tversky_loss(x1, y1))
    ref1 = _reference(x1, y1)
    assert jnp.allclose(out1, ref1, rtol=1e-5, atol=1e-6), (out1, ref1)

    # 2) numel % 128 != 0: exercises the masked ragged-tail path.
    x2 = jax.random.normal(k3, (3, 5, 7, 11), dtype=jnp.float32)
    y2 = (jax.random.uniform(k4, (3, 5, 7, 11)) > 0.5).astype(jnp.float32)
    out2 = jax.block_until_ready(focal_tversky_loss(x2, y2, gamma=2.0))
    ref2 = _reference(x2, y2, gamma=2.0)
    assert jnp.allclose(out2, ref2, rtol=1e-5, atol=1e-6), (out2, ref2)

    # 3) Odd block count with a tiny forced block size: exercises multi-step
    #    accumulation and the clamped, fully-masked trailing grid step.
    x3 = jax.random.normal(k5, (13, 32, 32), dtype=jnp.float32)
    y3 = (jax.random.uniform(k6, (13, 32, 32)) > 0.5).astype(jnp.float32)
    out3 = jax.block_until_ready(
        focal_tversky_loss(x3, y3, target_block_bytes=4096))
    ref3 = _reference(x3, y3)
    assert jnp.allclose(out3, ref3, rtol=1e-5, atol=1e-6), (out3, ref3)

    print("KERNEL_OK")
</pallas_src>

<mosaic_0001>
module attributes {stable_mosaic.version = 11 : i64} {
  func.func @_focal_tversky_partial_kernel(%arg0: i32, %arg1: i32, %arg2: memref<8x128xf32, #tpu.memory_space<vmem>>, %arg3: memref<8x128xf32, #tpu.memory_space<vmem>>, %arg4: memref<1x8x128xf32, #tpu.memory_space<vmem>>, %arg5: memref<1x8x128xf32, #tpu.memory_space<vmem>>, %arg6: memref<1x8x128xf32, #tpu.memory_space<vmem>>) attributes {dimension_semantics = [#tpu.dimension_semantics<parallel>, #tpu.dimension_semantics<arbitrary>], iteration_bounds = array<i64: 2, 1>, scalar_prefetch = 0 : i64, scratch_operands = 0 : i64, tpu.core_type = #tpu.core_type<tc>, window_params = [{transform_indices = @transform_0, window_bounds = array<i64: 8, 128>}, {transform_indices = @transform_1, window_bounds = array<i64: 8, 128>}, {transform_indices = @transform_2, window_bounds = array<i64: 1, 8, 128>}, {transform_indices = @transform_3, window_bounds = array<i64: 1, 8, 128>}, {transform_indices = @transform_4, window_bounds = array<i64: 1, 8, 128>}]} {
    %c0_i32 = arith.constant 0 : i32
    %0 = arith.cmpi eq, %arg1, %c0_i32 : i32
    %1 = arith.extui %0 : i1 to i32
    %c0_i32_0 = arith.constant 0 : i32
    %2 = arith.cmpi ne, %1, %c0_i32_0 : i32
    scf.if %2 {
      %cst_9 = arith.constant 0.000000e+00 : f32
      %21 = vector.broadcast %cst_9 : f32 to vector<1x8x128xf32>
      %c0_10 = arith.constant 0 : index
      %c0_11 = arith.constant 0 : index
      %c0_12 = arith.constant 0 : index
      %22 = vector.load %arg4[%c0_10, %c0_11, %c0_12] : memref<1x8x128xf32, #tpu.memory_space<vmem>>, vector<1x8x128xf32>
      tpu.vector_store %arg4[%c0_10, %c0_11, %c0_12], %21 {strides = array<i32>} : memref<1x8x128xf32, #tpu.memory_space<vmem>>, vector<1x8x128xf32>,
      %cst_13 = arith.constant 0.000000e+00 : f32
      %23 = vector.broadcast %cst_13 : f32 to vector<1x8x128xf32>
      %c0_14 = arith.constant 0 : index
      %c0_15 = arith.constant 0 : index
      %c0_16 = arith.constant 0 : index
      %24 = vector.load %arg5[%c0_14, %c0_15, %c0_16] : memref<1x8x128xf32, #tpu.memory_space<vmem>>, vector<1x8x128xf32>
      tpu.vector_store %arg5[%c0_14, %c0_15, %c0_16], %23 {strides = array<i32>} : memref<1x8x128xf32, #tpu.memory_space<vmem>>, vector<1x8x128xf32>,
      %cst_17 = arith.constant 0.000000e+00 : f32
      %25 = vector.broadcast %cst_17 : f32 to vector<1x8x128xf32>
      %c0_18 = arith.constant 0 : index
      %c0_19 = arith.constant 0 : index
      %c0_20 = arith.constant 0 : index
      %26 = vector.load %arg6[%c0_18, %c0_19, %c0_20] : memref<1x8x128xf32, #tpu.memory_space<vmem>>, vector<1x8x128xf32>
      tpu.vector_store %arg6[%c0_18, %c0_19, %c0_20], %25 {strides = array<i32>} : memref<1x8x128xf32, #tpu.memory_space<vmem>>, vector<1x8x128xf32>,
    } else {
    }
    %c0 = arith.constant 0 : index
    %c0_1 = arith.constant 0 : index
    %3 = vector.load %arg2[%c0, %c0_1] : memref<8x128xf32, #tpu.memory_space<vmem>>, vector<8x128xf32>
    %c0_2 = arith.constant 0 : index
    %c0_3 = arith.constant 0 : index
    %4 = vector.load %arg3[%c0_2, %c0_3] : memref<8x128xf32, #tpu.memory_space<vmem>>, vector<8x128xf32>
    %5 = arith.negf %3 : vector<8x128xf32>
    %6 = math.exp %5 : vector<8x128xf32>
    %cst = arith.constant 1.000000e+00 : f32
    %7 = vector.broadcast %cst : f32 to vector<8x128xf32>
    %8 = arith.addf %7, %6 : vector<8x128xf32>
    %9 = arith.divf %7, %8 : vector<8x128xf32>
    %c1_i32 = arith.constant 1 : i32
    %10 = arith.muli %arg0, %c1_i32 : i32
    %11 = arith.addi %10, %arg1 : i32
    %c1024_i32 = arith.constant 1024 : i32
    %12 = arith.muli %11, %c1024_i32 : i32
    %c1024_i32_4 = arith.constant 1024 : i32
    %13 = arith.addi %12, %c1024_i32_4 : i32
    %c2048_i32 = arith.constant 2048 : i32
    %14 = arith.cmpi sle, %13, %c2048_i32 : i32
    %15 = arith.extui %14 : i1 to i32
    %c0_i32_5 = arith.constant 0 : i32
    %16 = arith.cmpi ne, %15, %c0_i32_5 : i32
    scf.if %16 {
      %c0_9 = arith.constant 0 : index
      %c0_10 = arith.constant 0 : index
      %c0_11 = arith.constant 0 : index
      %21 = vector.load %arg4[%c0_9, %c0_10, %c0_11] : memref<1x8x128xf32, #tpu.memory_space<vmem>>, vector<1x8x128xf32>
      %22 = vector.shape_cast %21 : vector<1x8x128xf32> to vector<8x128xf32>
      %23 = arith.mulf %9, %4 : vector<8x128xf32>
      %24 = vector.shape_cast %23 : vector<8x128xf32> to vector<1x8x128xf32>
      %cst_12 = arith.constant dense<0.000000e+00> : vector<8x128xf32>
      %25 = vector.multi_reduction <add>, %24, %cst_12 [0] : vector<1x8x128xf32> to vector<8x128xf32>
      %26 = arith.addf %22, %25 : vector<8x128xf32>
      %c0_13 = arith.constant 0 : index
      %c0_14 = arith.constant 0 : index
      %c0_15 = arith.constant 0 : index
      %27 = vector.load %arg4[%c0_13, %c0_14, %c0_15] : memref<1x8x128xf32, #tpu.memory_space<vmem>>, vector<1x8x128xf32>
      %28 = vector.shape_cast %27 : vector<1x8x128xf32> to vector<8x128xf32>
      %29 = vector.shape_cast %26 : vector<8x128xf32> to vector<1x8x128xf32>
      tpu.vector_store %arg4[%c0_13, %c0_14, %c0_15], %29 {strides = array<i32>} : memref<1x8x128xf32, #tpu.memory_space<vmem>>, vector<1x8x128xf32>,
      %c0_16 = arith.constant 0 : index
      %c0_17 = arith.constant 0 : index
      %c0_18 = arith.constant 0 : index
      %30 = vector.load %arg5[%c0_16, %c0_17, %c0_18] : memref<1x8x128xf32, #tpu.memory_space<vmem>>, vector<1x8x128xf32>
      %31 = vector.shape_cast %30 : vector<1x8x128xf32> to vector<8x128xf32>
      %32 = vector.shape_cast %9 : vector<8x128xf32> to vector<1x8x128xf32>
      %cst_19 = arith.constant dense<0.000000e+00> : vector<8x128xf32>
      %33 = vector.multi_reduction <add>, %32, %cst_19 [0] : vector<1x8x128xf32> to vector<8x128xf32>
      %34 = arith.addf %31, %33 : vector<8x128xf32>
      %c0_20 = arith.constant 0 : index
      %c0_21 = arith.constant 0 : index
      %c0_22 = arith.constant 0 : index
      %35 = vector.load %arg5[%c0_20, %c0_21, %c0_22] : memref<1x8x128xf32, #tpu.memory_space<vmem>>, vector<1x8x128xf32>
      %36 = vector.shape_cast %35 : vector<1x8x128xf32> to vector<8x128xf32>
      %37 = vector.shape_cast %34 : vector<8x128xf32> to vector<1x8x128xf32>
      tpu.vector_store %arg5[%c0_20, %c0_21, %c0_22], %37 {strides = array<i32>} : memref<1x8x128xf32, #tpu.memory_space<vmem>>, vector<1x8x128xf32>,
      %c0_23 = arith.constant 0 : index
      %c0_24 = arith.constant 0 : index
      %c0_25 = arith.constant 0 : index
      %38 = vector.load %arg6[%c0_23, %c0_24, %c0_25] : memref<1x8x128xf32, #tpu.memory_space<vmem>>, vector<1x8x128xf32>
      %39 = vector.shape_cast %38 : vector<1x8x128xf32> to vector<8x128xf32>
      %40 = vector.shape_cast %4 : vector<8x128xf32> to vector<1x8x128xf32>
      %cst_26 = arith.constant dense<0.000000e+00> : vector<8x128xf32>
      %41 = vector.multi_reduction <add>, %40, %cst_26 [0] : vector<1x8x128xf32> to vector<8x128xf32>
      %42 = arith.addf %39, %41 : vector<8x128xf32>
      %c0_27 = arith.constant 0 : index
      %c0_28 = arith.constant 0 : index
      %c0_29 = arith.constant 0 : index
      %43 = vector.load %arg6[%c0_27, %c0_28, %c0_29] : memref<1x8x128xf32, #tpu.memory_space<vmem>>, vector<1x8x128xf32>
      %44 = vector.shape_cast %43 : vector<1x8x128xf32> to vector<8x128xf32>
      %45 = vector.shape_cast %42 : vector<8x128xf32> to vector<1x8x128xf32>
      tpu.vector_store %arg6[%c0_27, %c0_28, %c0_29], %45 {strides = array<i32>} : memref<1x8x128xf32, #tpu.memory_space<vmem>>, vector<1x8x128xf32>,
    } else {
    }
    %c1024_i32_6 = arith.constant 1024 : i32
    %17 = arith.addi %12, %c1024_i32_6 : i32
    %c2048_i32_7 = arith.constant 2048 : i32
    %18 = arith.cmpi sgt, %17, %c2048_i32_7 : i32
    %19 = arith.extui %18 : i1 to i32
    %c0_i32_8 = arith.constant 0 : i32
    %20 = arith.cmpi ne, %19, %c0_i32_8 : i32
    scf.if %20 {
      %21 = tpu.iota {dimensions = array<i32: 0>} : vector<8x128xi32>
      %22 = tpu.iota {dimensions = array<i32: 1>} : vector<8x128xi32>
      %c128_i32 = arith.constant 128 : i32
      %23 = vector.broadcast %c128_i32 : i32 to vector<8x128xi32>
      %24 = arith.muli %21, %23 : vector<8x128xi32>
      %25 = arith.addi %24, %22 : vector<8x128xi32>
      %c2048_i32_9 = arith.constant 2048 : i32
      %26 = arith.subi %c2048_i32_9, %12 : i32
      %27 = vector.broadcast %26 : i32 to vector<8x128xi32>
      %28 = arith.cmpi slt, %25, %27 : vector<8x128xi32>
      %cst_10 = arith.constant 0.000000e+00 : f32
      %29 = vector.broadcast %cst_10 : f32 to vector<8x128xf32>
      %30 = arith.select %28, %9, %29 : vector<8x128xi1>, vector<8x128xf32>
      %cst_11 = arith.constant 0.000000e+00 : f32
      %31 = vector.broadcast %cst_11 : f32 to vector<8x128xf32>
      %32 = arith.select %28, %4, %31 : vector<8x128xi1>, vector<8x128xf32>
      %c0_12 = arith.constant 0 : index
      %c0_13 = arith.constant 0 : index
      %c0_14 = arith.constant 0 : index
      %33 = vector.load %arg4[%c0_12, %c0_13, %c0_14] : memref<1x8x128xf32, #tpu.memory_space<vmem>>, vector<1x8x128xf32>
      %34 = vector.shape_cast %33 : vector<1x8x128xf32> to vector<8x128xf32>
      %35 = arith.mulf %30, %32 : vector<8x128xf32>
      %36 = vector.shape_cast %35 : vector<8x128xf32> to vector<1x8x128xf32>
      %cst_15 = arith.constant dense<0.000000e+00> : vector<8x128xf32>
      %37 = vector.multi_reduction <add>, %36, %cst_15 [0] : vector<1x8x128xf32> to vector<8x128xf32>
      %38 = arith.addf %34, %37 : vector<8x128xf32>
      %c0_16 = arith.constant 0 : index
      %c0_17 = arith.constant 0 : index
      %c0_18 = arith.constant 0 : index
      %39 = vector.load %arg4[%c0_16, %c0_17, %c0_18] : memref<1x8x128xf32, #tpu.memory_space<vmem>>, vector<1x8x128xf32>
      %40 = vector.shape_cast %39 : vector<1x8x128xf32> to vector<8x128xf32>
      %41 = vector.shape_cast %38 : vector<8x128xf32> to vector<1x8x128xf32>
      tpu.vector_store %arg4[%c0_16, %c0_17, %c0_18], %41 {strides = array<i32>} : memref<1x8x128xf32, #tpu.memory_space<vmem>>, vector<1x8x128xf32>,
      %c0_19 = arith.constant 0 : index
      %c0_20 = arith.constant 0 : index
      %c0_21 = arith.constant 0 : index
      %42 = vector.load %arg5[%c0_19, %c0_20, %c0_21] : memref<1x8x128xf32, #tpu.memory_space<vmem>>, vector<1x8x128xf32>
      %43 = vector.shape_cast %42 : vector<1x8x128xf32> to vector<8x128xf32>
      %44 = vector.shape_cast %30 : vector<8x128xf32> to vector<1x8x128xf32>
      %cst_22 = arith.constant dense<0.000000e+00> : vector<8x128xf32>
      %45 = vector.multi_reduction <add>, %44, %cst_22 [0] : vector<1x8x128xf32> to vector<8x128xf32>
      %46 = arith.addf %43, %45 : vector<8x128xf32>
      %c0_23 = arith.constant 0 : index
      %c0_24 = arith.constant 0 : index
      %c0_25 = arith.constant 0 : index
      %47 = vector.load %arg5[%c0_23, %c0_24, %c0_25] : memref<1x8x128xf32, #tpu.memory_space<vmem>>, vector<1x8x128xf32>
      %48 = vector.shape_cast %47 : vector<1x8x128xf32> to vector<8x128xf32>
      %49 = vector.shape_cast %46 : vector<8x128xf32> to vector<1x8x128xf32>
      tpu.vector_store %arg5[%c0_23, %c0_24, %c0_25], %49 {strides = array<i32>} : memref<1x8x128xf32, #tpu.memory_space<vmem>>, vector<1x8x128xf32>,
      %c0_26 = arith.constant 0 : index
      %c0_27 = arith.constant 0 : index
      %c0_28 = arith.constant 0 : index
      %50 = vector.load %arg6[%c0_26, %c0_27, %c0_28] : memref<1x8x128xf32, #tpu.memory_space<vmem>>, vector<1x8x128xf32>
      %51 = vector.shape_cast %50 : vector<1x8x128xf32> to vector<8x128xf32>
      %52 = vector.shape_cast %32 : vector<8x128xf32> to vector<1x8x128xf32>
      %cst_29 = arith.constant dense<0.000000e+00> : vector<8x128xf32>
      %53 = vector.multi_reduction <add>, %52, %cst_29 [0] : vector<1x8x128xf32> to vector<8x128xf32>
      %54 = arith.addf %51, %53 : vector<8x128xf32>
      %c0_30 = arith.constant 0 : index
      %c0_31 = arith.constant 0 : index
      %c0_32 = arith.constant 0 : index
      %55 = vector.load %arg6[%c0_30, %c0_31, %c0_32] : memref<1x8x128xf32, #tpu.memory_space<vmem>>, vector<1x8x128xf32>
      %56 = vector.shape_cast %55 : vector<1x8x128xf32> to vector<8x128xf32>
      %57 = vector.shape_cast %54 : vector<8x128xf32> to vector<1x8x128xf32>
      tpu.vector_store %arg6[%c0_30, %c0_31, %c0_32], %57 {strides = array<i32>} : memref<1x8x128xf32, #tpu.memory_space<vmem>>, vector<1x8x128xf32>,
    } else {
    }
    return
  }
  func.func @transform_0(%arg0: i32, %arg1: i32) -> (i32, i32) {
    %c1_i32 = arith.constant 1 : i32
    %0 = arith.muli %arg0, %c1_i32 : i32
    %1 = arith.addi %0, %arg1 : i32
    %c1_i32_0 = arith.constant 1 : i32
    %2 = arith.minsi %1, %c1_i32_0 : i32
    %c0_i32 = arith.constant 0 : i32
    %c0_i32_1 = arith.constant 0 : i32
    return %2, %c0_i32 : i32, i32
  }
  func.func @transform_1(%arg0: i32, %arg1: i32) -> (i32, i32) {
    %c1_i32 = arith.constant 1 : i32
    %0 = arith.muli %arg0, %c1_i32 : i32
    %1 = arith.addi %0, %arg1 : i32
    %c1_i32_0 = arith.constant 1 : i32
    %2 = arith.minsi %1, %c1_i32_0 : i32
    %c0_i32 = arith.constant 0 : i32
    %c0_i32_1 = arith.constant 0 : i32
    return %2, %c0_i32 : i32, i32
  }
  func.func @transform_2(%arg0: i32, %arg1: i32) -> (i32, i32, i32) {
    %c0_i32 = arith.constant 0 : i32
    %c0_i32_0 = arith.constant 0 : i32
    %c0_i32_1 = arith.constant 0 : i32
    return %arg0, %c0_i32, %c0_i32_0 : i32, i32, i32
  }
  func.func @transform_3(%arg0: i32, %arg1: i32) -> (i32, i32, i32) {
    %c0_i32 = arith.constant 0 : i32
    %c0_i32_0 = arith.constant 0 : i32
    %c0_i32_1 = arith.constant 0 : i32
    return %arg0, %c0_i32, %c0_i32_0 : i32, i32, i32
  }
  func.func @transform_4(%arg0: i32, %arg1: i32) -> (i32, i32, i32) {
    %c0_i32 = arith.constant 0 : i32
    %c0_i32_0 = arith.constant 0 : i32
    %c0_i32_1 = arith.constant 0 : i32
    return %arg0, %c0_i32, %c0_i32_0 : i32, i32, i32
  }
}

</mosaic_0001>

<llo_original>
// kernel: tpu_custom_call.1
$region0: #{tpu_custom_call.1}
  #allocation0 [shape = 'u32[]', space=smem, size = 0x4, offset = 0x4, fixed_abs, tag = 'smem constant byte address 0x4 - core index']
  #allocation1 [shape = 'u32[144,128]{1,0:T(1,128)}', space=vmem, size = 0x12000, scoped, tag = 'internal scratch']
  %s0 = inlined_call_operand.hbm [shape: f32[16,128], index: 0, kind: input, shape index: {}]
  %s1 = inlined_call_operand.hbm [shape: f32[16,128], index: 1, kind: input, shape index: {}]
  %s2 = inlined_call_operand.hbm [shape: f32[2,8,128], index: 2, kind: output, shape index: {0}]
  %s3 = inlined_call_operand.hbm [shape: f32[2,8,128], index: 3, kind: output, shape index: {1}]
  %s4 = inlined_call_operand.hbm [shape: f32[2,8,128], index: 4, kind: output, shape index: {2}]
  %5 = xla_tuple %s2, %s3, %s4
  %s6 = sld [smem:[#allocation0]]
  $region77: #{tpu_custom_call.1} parent=0
    _
  %s8 = ssub.s32 1, %s6
  %s9 = scalar_select 0, %s8, %s6
  $region1: #{tpu_custom_call.1} parent=0
    #allocation2 [shape = 'u8[8192]{0}', space=vmem, size = 0x2000, scoped, tag = 'input window, operand 0']
    #allocation3 [shape = 's32[2]{0}', space=sflag, size = 0x8, scoped, tag = 'scoped memory for tpu_custom_call.1']
    #allocation4 [shape = 's32[2]{0}', space=sflag, size = 0x8, scoped, tag = 'scoped memory for tpu_custom_call.1']
    #allocation5 [shape = 'u8[8192]{0}', space=vmem, size = 0x2000, scoped, tag = 'input window, operand 1']
    #allocation6 [shape = 's32[2]{0}', space=sflag, size = 0x8, scoped, tag = 'scoped memory for tpu_custom_call.1']
    #allocation7 [shape = 'u8[8192]{0}', space=vmem, size = 0x2000, scoped, tag = 'output window, operand 0']
    #allocation8 [shape = 'u8[8192]{0}', space=vmem, size = 0x2000, scoped, tag = 'output window, operand 1']
    #allocation9 [shape = 's32[2]{0}', space=sflag, size = 0x8, scoped, tag = 'scoped memory for tpu_custom_call.1']
    #allocation10 [shape = 'u8[8192]{0}', space=vmem, size = 0x2000, scoped, tag = 'output window, operand 2']
    %10 = vsyncpa [#allocation3], 0
    %s11 = scalar_lea.sflag [#allocation3], 1
    %12 = vsyncpa %s11, 0
    %13 = vsyncpa [#allocation6], 0
    %s14 = scalar_lea.sflag [#allocation6], 1
    %15 = vsyncpa %s14, 0
    %16 = vsyncpa [#allocation4], 0
    %s17 = scalar_lea.sflag [#allocation4], 1
    %18 = vsyncpa %s17, 0
    %19 = vsyncpa [#allocation9], 0
    %s20 = scalar_lea.sflag [#allocation9], 1
    %21 = vsyncpa %s20, 0
    loop: start=0, step=1, limit=4
    $region2: #{tpu_custom_call.1} parent=1 // loop_pre_header
      _
    $region3: #{tpu_custom_call.1} parent=1 // loop_header
      %s23 = sphi 0, %s27
      %p24 = scmp.ge.s32.totalorder %s23, 4
      %s30 = sphi 0, %s42
      %s31 = sphi 0, %s38
      %s32 = sphi 0, %s30
      %s33 = sphi 0, %s31
      %s34 = sphi 0, %s32
      %s35 = sphi 0, %s33
      %s51 = sphi 0, %s53
      %s54 = sphi 0, %s51
      %s55 = sphi 0, %s54
      %s71 = sphi 0, %s55
      %s83 = sphi 0, %s85
      %s86 = sphi 0, %s83
      %s87 = sphi 0, %s86
      %s103 = sphi 0, %s87
      %s109 = sphi 0, %s111
      %s112 = sphi 0, %s109
      %s113 = sphi 0, %s112
      %s129 = sphi 0, %s113
      %s135 = sphi 0, %s137
      %s138 = sphi 0, %s135
      %s139 = sphi 0, %s138
      %s155 = sphi 0, %s139
      %s161 = sphi 0, %s163
      %s164 = sphi 0, %s161
      %s165 = sphi 0, %s164
      %s181 = sphi 0, %s165
    $region4: #{tpu_custom_call.1} parent=1 // loop_header_branch
      %26 = sbr.rel (%p24) target = $region8
    $region5: #{tpu_custom_call.1} parent=1 // loop_body
      %s28 = ssub.s32 %s23, 1
      %s29 = ssub.s32 %s23, 2
      %s36 = sadd.s32 1, %s31
      %p37 = scmp.ge.s32.totalorder %s36, 1
      %s38 = scalar_select %p37, 0, %s36
      %s39 = sadd.s32 1, %s30
      %s40 = scalar_select %p37, %s39, %s30
      %p41 = scmp.ge.s32.totalorder %s40, 2
      %s42 = scalar_select %p41, 0, %s40
      %s43 = sadd.s32 %s30, %s31
      %p44 = scmp.lt.s32.totalorder %s43, 1
      %s45 = scalar_select %p44, %s43, 1
      %s46 = sadd.s32 %s42, %s38
      %p47 = scmp.lt.s32.totalorder %s46, 1
      %s48 = scalar_select %p47, %s46, 1
      %s49 = ssub.s32 %s45, %s48
      %p50 = scmp.eq.s32.totalorder %s49, 0
      %s52 = sadd.s32 %s51, 1
      %s53 = scalar_select %p50, %s51, %s52
      %p56 = pneg %p50
      %p57 = scmp.eq.s32.totalorder %s23, 1
      %p58 = por %p56, %p57
      %p59 = scmp.ne.s32.totalorder %s51, %s54
      %p60 = scmp.eq.s32.totalorder %s23, 0
      %p61 = por %p59, %p60
      %p62 = scmp.ne.s32.totalorder %s51, %s54
      %p63 = scmp.eq.s32.totalorder %s28, 1
      %p64 = por %p62, %p63
      %p65 = scmp.ne.s32.totalorder %s54, %s55
      %p66 = scmp.eq.s32.totalorder %s28, 0
      %p67 = por %p65, %p66
      %p68 = scmp.ne.s32.totalorder %s54, %s55
      %p69 = scmp.eq.s32.totalorder %s29, 1
      %p70 = por %p68, %p69
      %p72 = scmp.ne.s32.totalorder %s55, %s71
      %p73 = scmp.eq.s32.totalorder %s29, 0
      %p74 = por %p72, %p73
      %s75 = sadd.s32 %s30, %s31
      %p76 = scmp.lt.s32.totalorder %s75, 1
      %s77 = scalar_select %p76, %s75, 1
      %s78 = sadd.s32 %s42, %s38
      %p79 = scmp.lt.s32.totalorder %s78, 1
      %s80 = scalar_select %p79, %s78, 1
      %s81 = ssub.s32 %s77, %s80
      %p82 = scmp.eq.s32.totalorder %s81, 0
      %s84 = sadd.s32 %s83, 1
      %s85 = scalar_select %p82, %s83, %s84
      %p88 = pneg %p82
      %p89 = scmp.eq.s32.totalorder %s23, 1
      %p90 = por %p88, %p89
      %p91 = scmp.ne.s32.totalorder %s83, %s86
      %p92 = scmp.eq.s32.totalorder %s23, 0
      %p93 = por %p91, %p92
      %p94 = scmp.ne.s32.totalorder %s83, %s86
      %p95 = scmp.eq.s32.totalorder %s28, 1
      %p96 = por %p94, %p95
      %p97 = scmp.ne.s32.totalorder %s86, %s87
      %p98 = scmp.eq.s32.totalorder %s28, 0
      %p99 = por %p97, %p98
      %p100 = scmp.ne.s32.totalorder %s86, %s87
      %p101 = scmp.eq.s32.totalorder %s29, 1
      %p102 = por %p100, %p101
      %p104 = scmp.ne.s32.totalorder %s87, %s103
      %p105 = scmp.eq.s32.totalorder %s29, 0
      %p106 = por %p104, %p105
      %s107 = ssub.s32 %s30, %s42
      %p108 = scmp.eq.s32.totalorder %s107, 0
      %s110 = sadd.s32 %s109, 1
      %s111 = scalar_select %p108, %s109, %s110
      %p114 = pneg %p108
      %p115 = scmp.eq.s32.totalorder %s23, 1
      %p116 = por %p114, %p115
      %p117 = scmp.ne.s32.totalorder %s109, %s112
      %p118 = scmp.eq.s32.totalorder %s23, 0
      %p119 = por %p117, %p118
      %p120 = scmp.ne.s32.totalorder %s109, %s112
      %p121 = scmp.eq.s32.totalorder %s28, 1
      %p122 = por %p120, %p121
      %p123 = scmp.ne.s32.totalorder %s112, %s113
      %p124 = scmp.eq.s32.totalorder %s28, 0
      %p125 = por %p123, %p124
      %p126 = scmp.ne.s32.totalorder %s112, %s113
      %p127 = scmp.eq.s32.totalorder %s29, 1
      %p128 = por %p126, %p127
      %p130 = scmp.ne.s32.totalorder %s113, %s129
      %p131 = scmp.eq.s32.totalorder %s29, 0
      %p132 = por %p130, %p131
      %s133 = ssub.s32 %s30, %s42
      %p134 = scmp.eq.s32.totalorder %s133, 0
      %s136 = sadd.s32 %s135, 1
      %s137 = scalar_select %p134, %s135, %s136
      %p140 = pneg %p134
      %p141 = scmp.eq.s32.totalorder %s23, 1
      %p142 = por %p140, %p141
      %p143 = scmp.ne.s32.totalorder %s135, %s138
      %p144 = scmp.eq.s32.totalorder %s23, 0
      %p145 = por %p143, %p144
      %p146 = scmp.ne.s32.totalorder %s135, %s138
      %p147 = scmp.eq.s32.totalorder %s28, 1
      %p148 = por %p146, %p147
      %p149 = scmp.ne.s32.totalorder %s138, %s139
      %p150 = scmp.eq.s32.totalorder %s28, 0
      %p151 = por %p149, %p150
      %p152 = scmp.ne.s32.totalorder %s138, %s139
      %p153 = scmp.eq.s32.totalorder %s29, 1
      %p154 = por %p152, %p153
      %p156 = scmp.ne.s32.totalorder %s139, %s155
      %p157 = scmp.eq.s32.totalorder %s29, 0
      %p158 = por %p156, %p157
      %s159 = ssub.s32 %s30, %s42
      %p160 = scmp.eq.s32.totalorder %s159, 0
      %s162 = sadd.s32 %s161, 1
      %s163 = scalar_select %p160, %s161, %s162
      %p166 = pneg %p160
      %p167 = scmp.eq.s32.totalorder %s23, 1
      %p168 = por %p166, %p167
      %p169 = scmp.ne.s32.totalorder %s161, %s164
      %p170 = scmp.eq.s32.totalorder %s23, 0
      %p171 = por %p169, %p170
      %p172 = scmp.ne.s32.totalorder %s161, %s164
      %p173 = scmp.eq.s32.totalorder %s28, 1
      %p174 = por %p172, %p173
      %p175 = scmp.ne.s32.totalorder %s164, %s165
      %p176 = scmp.eq.s32.totalorder %s28, 0
      %p177 = por %p175, %p176
      %p178 = scmp.ne.s32.totalorder %s164, %s165
      %p179 = scmp.eq.s32.totalorder %s29, 1
      %p180 = por %p178, %p179
      %p182 = scmp.ne.s32.totalorder %s165, %s181
      %p183 = scmp.eq.s32.totalorder %s29, 0
      %p184 = por %p182, %p183
      %p185 = scmp.le.s32.totalorder 1, %s23
      %p186 = scmp.lt.s32.totalorder %s23, 3
      %p187 = pnand %p185, %p186
      %p188 = pneg %p187
      // Predicated region
      $region9: #{tpu_custom_call.1} parent=5 // pred_check
        _
      $region10: #{tpu_custom_call.1} parent=5 // pred_check_branch
        %190 = sbr.rel (%p187) target = $region12
      $region11: #{tpu_custom_call.1} parent=5 // pred_region
        %s191 = ssub.s32 %s23, 1
      $region12: #{tpu_custom_call.1} parent=5 // pred_fallthru
        _
      %p192 = scmp.lt.s32.totalorder %s23, 2
      // Predicated region
      $region13: #{tpu_custom_call.1} parent=5 // pred_check
        %p193 = pneg %p192
      $region14: #{tpu_custom_call.1} parent=5 // pred_check_branch
        %195 = sbr.rel (%p193) target = $region16
      $region15: #{tpu_custom_call.1} parent=5 // pred_region
        // Predicated region
        $region17: #{tpu_custom_call.1} parent=15 // pred_check
          %p196 = pneg %p61
        $region18: #{tpu_custom_call.1} parent=15 // pred_check_branch
          %198 = sbr.rel (%p196) target = $region20
        $region19: #{tpu_custom_call.1} parent=15 // pred_region
          %s199 = sand.u32 %s51, 1
          %s200 = scalar_lea.sflag [#allocation3], %s199
          %s201 = sand.u32 %s51, 1
          %s202 = smul.addr %s201, 8
          %s203 = scalar_lea.vmem [#allocation2], %s202
          %s204 = sadd.s32 %s30, %s31
          %p205 = scmp.lt.s32.totalorder %s204, 1
          %s206 = scalar_select %p205, %s204, 1
          %s208 = ssub.s32 128, 128
          %209 = vsyncadd %s200, %s208
          %s210 = smul.addr %s206, 128
          %s211 = scalar_lea.hbm %s0, %s210
          %s213 = sshll.u32 %s203, 4
          %s214 = int_to_ptr.vmem [resolvable:$true] %s213
          %216 = dma.hbm_to_vmem [thread:$0]  %s211, 128, %s214, %s200
        $region20: #{tpu_custom_call.1} parent=15 // pred_fallthru
          _
        // Predicated region
        $region21: #{tpu_custom_call.1} parent=15 // pred_check
          %p217 = pneg %p93
        $region22: #{tpu_custom_call.1} parent=15 // pred_check_branch
          %219 = sbr.rel (%p217) target = $region24
        $region23: #{tpu_custom_call.1} parent=15 // pred_region
          %s220 = sand.u32 %s83, 1
          %s221 = scalar_lea.sflag [#allocation6], %s220
          %s222 = sand.u32 %s83, 1
          %s223 = smul.addr %s222, 8
          %s224 = scalar_lea.vmem [#allocation5], %s223
          %s225 = sadd.s32 %s30, %s31
          %p226 = scmp.lt.s32.totalorder %s225, 1
          %s227 = scalar_select %p226, %s225, 1
          %s229 = ssub.s32 128, 128
          %230 = vsyncadd %s221, %s229
          %s231 = smul.addr %s227, 128
          %s232 = scalar_lea.hbm %s1, %s231
          %s234 = sshll.u32 %s224, 4
          %s235 = int_to_ptr.vmem [resolvable:$true] %s234
          %237 = dma.hbm_to_vmem [thread:$0]  %s232, 128, %s235, %s221
        $region24: #{tpu_custom_call.1} parent=15 // pred_fallthru
          _
      $region16: #{tpu_custom_call.1} parent=5 // pred_fallthru
        _
      %p238 = scmp.le.s32.totalorder 1, %s23
      %p239 = scmp.lt.s32.totalorder %s23, 3
      %p240 = pnand %p238, %p239
      %p241 = pneg %p240
      // Predicated region
      $region25: #{tpu_custom_call.1} parent=5 // pred_check
        _
      $region26: #{tpu_custom_call.1} parent=5 // pred_check_branch
        %243 = sbr.rel (%p240) target = $region28
      $region27: #{tpu_custom_call.1} parent=5 // pred_region
        %s244 = ssub.s32 %s23, 1
        %s245 = sand.u32 %s54, 1
        %s246 = scalar_lea.sflag [#allocation3], %s245
        %s247 = sand.u32 %s54, 1
        %s248 = smul.addr %s247, 8
        %s249 = scalar_lea.vmem [#allocation2], %s248
        // Predicated region
        $region29: #{tpu_custom_call.1} parent=27 // pred_check
          %p250 = pneg %p67
        $region30: #{tpu_custom_call.1} parent=27 // pred_check_branch
          %252 = sbr.rel (%p250) target = $region32
        $region31: #{tpu_custom_call.1} parent=27 // pred_region
          %253 = dma.done %s246, 128
        $region32: #{tpu_custom_call.1} parent=27 // pred_fallthru
          _
        %s254 = sand.u32 %s86, 1
        %s255 = scalar_lea.sflag [#allocation6], %s254
        %s256 = sand.u32 %s86, 1
        %s257 = smul.addr %s256, 8
        %s258 = scalar_lea.vmem [#allocation5], %s257
        // Predicated region
        $region33: #{tpu_custom_call.1} parent=27 // pred_check
          %p259 = pneg %p99
        $region34: #{tpu_custom_call.1} parent=27 // pred_check_branch
          %261 = sbr.rel (%p259) target = $region36
        $region35: #{tpu_custom_call.1} parent=27 // pred_region
          %262 = dma.done %s255, 128
        $region36: #{tpu_custom_call.1} parent=27 // pred_fallthru
          _
        %s263 = sand.u32 %s54, 1
        %s264 = scalar_lea.sflag [#allocation3], %s263
        %s265 = sand.u32 %s54, 1
        %s266 = smul.addr %s265, 8
        %s267 = scalar_lea.vmem [#allocation2], %s266
        %p268 = pneg %p67
        %p269 = pneg %p64
        %s270 = sand.u32 %s86, 1
        %s271 = scalar_lea.sflag [#allocation6], %s270
        %s272 = sand.u32 %s86, 1
        %s273 = smul.addr %s272, 8
        %s274 = scalar_lea.vmem [#allocation5], %s273
        %p275 = pneg %p99
        %p276 = pneg %p96
        %p277 = pneg %p125
        %p278 = pneg %p122
        %s279 = sand.u32 %s112, 1
        %s280 = scalar_lea.sflag [#allocation4], %s279
        %s281 = sand.u32 %s112, 1
        %s282 = smul.addr %s281, 8
        %s283 = scalar_lea.vmem [#allocation7], %s282
        %p284 = pneg %p151
        %p285 = pneg %p148
        %s286 = sand.u32 %s28, 1
        %s287 = scalar_lea.sflag [#allocation9], %s286
        %s288 = sand.u32 %s138, 1
        %s289 = smul.addr %s288, 8
        %s290 = scalar_lea.vmem [#allocation8], %s289
        %p291 = pneg %p177
        %p292 = pneg %p174
        %s293 = sand.u32 %s28, 1
        %s294 = scalar_lea.sflag [#allocation9], %s293
        %s295 = sand.u32 %s164, 1
        %s296 = smul.addr %s295, 8
        %s297 = scalar_lea.vmem [#allocation10], %s296
        %s298 = sadd.s32 %s32, %s33
        %p299 = scmp.lt.s32.totalorder %s298, 1
        %s300 = scalar_select %p299, %s298, 1
        %s301 = sadd.s32 %s32, %s33
        %p302 = scmp.lt.s32.totalorder %s301, 1
        %s303 = scalar_select %p302, %s301, 1
        %p304 = scmp.eq.s32.totalorder %s33, 0
        // Predicated region
        $region37: #{tpu_custom_call.1} parent=27 // pred_check
          %p305 = pneg %p304
        $region38: #{tpu_custom_call.1} parent=27 // pred_check_branch
          %307 = sbr.rel (%p305) target = $region40
        $region39: #{tpu_custom_call.1} parent=27 // pred_region
          %308 = vst [vmem:[%s283] sm:$0xff] 0.0
          %309 = vst [vmem:[%s290] sm:$0xff] 0.0
          %310 = vst [vmem:[%s297] sm:$0xff] 0.0
        $region40: #{tpu_custom_call.1} parent=27 // pred_fallthru
          _
        %v311 = vld [vmem:[%s249] sm:$0xff]
        %v312 = vld [vmem:[%s258] sm:$0xff]
        %v313 = vxor.u32 %v311, 2147483648
        %v314 = vmul.f32 %v313, 1.442695
        %v315 = vpow.pop %v314
        %v316 = vadd.f32 %v315, 1.0
        %v317 = vrcp.pop %v316
        %v318 = vmul.f32 1.0, %v317
        %s319 = sadd.s32 %s32, %s33
        %s320 = smul.u32 %s319, 1024
        %s321 = sadd.s32 %s320, 1024
        %p322 = scmp.le.s32.totalorder %s321, 2048
        // Predicated region
        $region41: #{tpu_custom_call.1} parent=27 // pred_check
          %p323 = pneg %p322
        $region42: #{tpu_custom_call.1} parent=27 // pred_check_branch
          %325 = sbr.rel (%p323) target = $region44
        $region43: #{tpu_custom_call.1} parent=27 // pred_region
          %v326 = vld [vmem:[%s283] sm:$0xff]
          %v327 = vmul.f32 %v318, %v312
          %v328 = vadd.f32 %v327, 0.0
          %v329 = vadd.f32 %v326, %v328
          %330 = vst [vmem:[%s283] sm:$0xff] %v329
          %v331 = vld [vmem:[%s290] sm:$0xff]
          %v332 = vadd.f32 %v318, 0.0
          %v333 = vadd.f32 %v331, %v332
          %334 = vst [vmem:[%s290] sm:$0xff] %v333
          %v335 = vld [vmem:[%s297] sm:$0xff]
          %v336 = vadd.f32 %v312, 0.0
          %v337 = vadd.f32 %v335, %v336
          %338 = vst [vmem:[%s297] sm:$0xff] %v337
        $region44: #{tpu_custom_call.1} parent=27 // pred_fallthru
          _
        %p339 = scmp.gt.s32.totalorder %s321, 2048
        // Predicated region
        $region45: #{tpu_custom_call.1} parent=27 // pred_check
          %p340 = pneg %p339
        $region46: #{tpu_custom_call.1} parent=27 // pred_check_branch
          %342 = sbr.rel (%p340) target = $region48
        $region47: #{tpu_custom_call.1} parent=27 // pred_region
          %v343 = vlaneseq
          %v344 = vshrl.u32 %v343, 7
          %v345 = vlaneseq
          %v346 = vand.u32 %v345, 127
          %v347 = vmul.u32 %v344, 128
          %v348 = vadd.s32 %v347, %v346
          %s349 = ssub.s32 2048, %s320
          %v350 = vstv %s349
          %vm351 = vcmp.lt.s32.totalorder %v348, %v350
          %v352 = vsel %vm351, %v318, 0.0
          %v353 = vsel %vm351, %v312, 0.0
          %v354 = vld [vmem:[%s283] sm:$0xff]
          %v355 = vmul.f32 %v352, %v353
          %v356 = vadd.f32 %v355, 0.0
          %v357 = vadd.f32 %v354, %v356
          %358 = vst [vmem:[%s283] sm:$0xff] %v357
          %v359 = vld [vmem:[%s290] sm:$0xff]
          %v360 = vadd.f32 %v352, 0.0
          %v361 = vadd.f32 %v359, %v360
          %362 = vst [vmem:[%s290] sm:$0xff] %v361
          %v363 = vld [vmem:[%s297] sm:$0xff]
          %v364 = vadd.f32 %v353, 0.0
          %v365 = vadd.f32 %v363, %v364
          %366 = vst [vmem:[%s297] sm:$0xff] %v365
        $region48: #{tpu_custom_call.1} parent=27 // pred_fallthru
          _
        %s367 = sand.u32 %s112, 1
        %s368 = scalar_lea.sflag [#allocation4], %s367
        %s369 = sand.u32 %s112, 1
        %s370 = smul.addr %s369, 8
        %s371 = scalar_lea.vmem [#allocation7], %s370
        %s372 = sand.u32 %s28, 1
        %s373 = scalar_lea.sflag [#allocation9], %s372
        %s374 = sand.u32 %s138, 1
        %s375 = smul.addr %s374, 8
        %s376 = scalar_lea.vmem [#allocation8], %s375
        %s377 = sand.u32 %s28, 1
        %s378 = scalar_lea.sflag [#allocation9], %s377
        %s379 = sand.u32 %s164, 1
        %s380 = smul.addr %s379, 8
        %s381 = scalar_lea.vmem [#allocation10], %s380
        // Predicated region
        $region49: #{tpu_custom_call.1} parent=27 // pred_check
          %p382 = pneg %p122
        $region50: #{tpu_custom_call.1} parent=27 // pred_check_branch
          %384 = sbr.rel (%p382) target = $region52
        $region51: #{tpu_custom_call.1} parent=27 // pred_region
          %s386 = ssub.s32 128, 128
          %387 = vsyncadd %s368, %s386
          %s388 = smul.addr %s32, 128
          %s389 = scalar_lea.hbm %s2, %s388
          %s391 = sshll.u32 %s371, 4
          %s392 = int_to_ptr.vmem [resolvable:$true] %s391
          %394 = dma.vmem_to_hbm [thread:$0]  %s392, 128, %s389, %s368
        $region52: #{tpu_custom_call.1} parent=27 // pred_fallthru
          _
        // Predicated region
        $region53: #{tpu_custom_call.1} parent=27 // pred_check
          %p395 = pneg %p148
        $region54: #{tpu_custom_call.1} parent=27 // pred_check_branch
          %397 = sbr.rel (%p395) target = $region56
        $region55: #{tpu_custom_call.1} parent=27 // pred_region
          %s399 = ssub.s32 128, 128
          %400 = vsyncadd %s373, %s399
          %s401 = smul.addr %s32, 128
          %s402 = scalar_lea.hbm %s3, %s401
          %s404 = sshll.u32 %s376, 4
          %s405 = int_to_ptr.vmem [resolvable:$true] %s404
          %407 = dma.vmem_to_hbm [thread:$0]  %s405, 128, %s402, %s373
        $region56: #{tpu_custom_call.1} parent=27 // pred_fallthru
          _
        // Predicated region
        $region57: #{tpu_custom_call.1} parent=27 // pred_check
          %p408 = pneg %p174
        $region58: #{tpu_custom_call.1} parent=27 // pred_check_branch
          %410 = sbr.rel (%p408) target = $region60
        $region59: #{tpu_custom_call.1} parent=27 // pred_region
          %s412 = ssub.s32 128, 128
          %413 = vsyncadd %s378, %s412
          %s414 = smul.addr %s32, 128
          %s415 = scalar_lea.hbm %s4, %s414
          %s417 = sshll.u32 %s381, 4
          %s418 = int_to_ptr.vmem [resolvable:$true] %s417
          %420 = dma.vmem_to_hbm [thread:$0]  %s418, 128, %s415, %s378
        $region60: #{tpu_custom_call.1} parent=27 // pred_fallthru
          _
      $region28: #{tpu_custom_call.1} parent=5 // pred_fallthru
        _
      %p421 = scmp.le.s32.totalorder 2, %s23
      // Predicated region
      $region61: #{tpu_custom_call.1} parent=5 // pred_check
        %p422 = pneg %p421
      $region62: #{tpu_custom_call.1} parent=5 // pred_check_branch
        %424 = sbr.rel (%p422) target = $region64
      $region63: #{tpu_custom_call.1} parent=5 // pred_region
        %s425 = ssub.s32 %s23, 2
        // Predicated region
        $region65: #{tpu_custom_call.1} parent=63 // pred_check
          %p426 = pneg %p128
        $region66: #{tpu_custom_call.1} parent=63 // pred_check_branch
          %428 = sbr.rel (%p426) target = $region68
        $region67: #{tpu_custom_call.1} parent=63 // pred_region
          %s429 = sand.u32 %s113, 1
          %s430 = scalar_lea.sflag [#allocation4], %s429
          %s431 = sand.u32 %s113, 1
          %s432 = smul.addr %s431, 8
          %s433 = scalar_lea.vmem [#allocation7], %s432
          %434 = dma.done %s430, 128
        $region68: #{tpu_custom_call.1} parent=63 // pred_fallthru
          _
        // Predicated region
        $region69: #{tpu_custom_call.1} parent=63 // pred_check
          %p435 = pneg %p154
        $region70: #{tpu_custom_call.1} parent=63 // pred_check_branch
          %437 = sbr.rel (%p435) target = $region72
        $region71: #{tpu_custom_call.1} parent=63 // pred_region
          %s438 = sand.u32 %s29, 1
          %s439 = scalar_lea.sflag [#allocation9], %s438
          %s440 = sand.u32 %s139, 1
          %s441 = smul.addr %s440, 8
          %s442 = scalar_lea.vmem [#allocation8], %s441
          %443 = dma.done %s439, 128
        $region72: #{tpu_custom_call.1} parent=63 // pred_fallthru
          _
        // Predicated region
        $region73: #{tpu_custom_call.1} parent=63 // pred_check
          %p444 = pneg %p180
        $region74: #{tpu_custom_call.1} parent=63 // pred_check_branch
          %446 = sbr.rel (%p444) target = $region76
        $region75: #{tpu_custom_call.1} parent=63 // pred_region
          %s447 = sand.u32 %s29, 1
          %s448 = scalar_lea.sflag [#allocation9], %s447
          %s449 = sand.u32 %s165, 1
          %s450 = smul.addr %s449, 8
          %s451 = scalar_lea.vmem [#allocation10], %s450
          %452 = dma.done %s448, 128
        $region76: #{tpu_custom_call.1} parent=63 // pred_fallthru
          _
      $region64: #{tpu_custom_call.1} parent=5 // pred_fallthru
        _
    $region6: #{tpu_custom_call.1} parent=1 // loop_footer
      %s27 = sadd.s32 1, %s23
    $region7: #{tpu_custom_call.1} parent=1 // loop_footer_branch
      %22 = sbr.rel target = $region3
    $region8: #{tpu_custom_call.1} parent=1 // loop_exit
      _
    %453 = vsyncpa [#allocation3], 1
    %s454 = scalar_lea.sflag [#allocation3], 1
    %455 = vsyncpa %s454, 1
    %456 = vsyncpa [#allocation6], 1
    %s457 = scalar_lea.sflag [#allocation6], 1
    %458 = vsyncpa %s457, 1
    %459 = vsyncpa [#allocation4], 1
    %s460 = scalar_lea.sflag [#allocation4], 1
    %461 = vsyncpa %s460, 1
    %462 = vsyncpa [#allocation9], 1
    %s463 = scalar_lea.sflag [#allocation9], 1
    %464 = vsyncpa %s463, 1

</llo_original>
